<compile_context>
chip_gen: v7x
topology: tpu7x:2x2x1
jax: 0.10.0
libtpu: 0.0.40
codegen_flags: <defaults>
</compile_context>

<pallas_src>
import math

import jax
import jax.numpy as jnp
from jax.experimental import pallas as pl
from jax.experimental.pallas import tpu as pltpu

_LANE = 128
_TILE_BYTES = 4 << 20      # ~4 MiB per VMEM buffer (good on v5e/v6e/v7x)
_VMEM_LIMIT = 32 << 20     # 4 buffers x 4 MiB = 16 MiB << 32 MiB scoped limit
_BYPASS_BYTES = 1 << 20    # identity data path: skip Pallas below this size


def _copy_kernel(x_ref, o_ref):
    # Stage the current (tm, cols) tile through VMEM and write it back out.
    o_ref[...] = x_ref[...]


def _round_up(n: int, m: int) -> int:
    return ((n + m - 1) // m) * m


def _pallas_copy_2d(x2d: jax.Array) -> jax.Array:
    """Streaming VMEM copy of a 2-D array, tiled along rows."""
    rows, cols = x2d.shape
    itemsize = jnp.dtype(x2d.dtype).itemsize
    # Sublane quantum: 8 for 4-byte dtypes, 16 for 2-byte, 32 for 1-byte.
    sub = 8 * max(1, 4 // max(itemsize, 1))

    # ~4 MiB per (tm, cols) buffer, rounded down to the sublane quantum.
    tm = _TILE_BYTES // max(cols * itemsize, 1)
    tm = max(sub, (tm // sub) * sub)
    # Keep >= 2 grid steps for anything non-trivial so a 2-TC chip (v7x) can
    # shard the "parallel" axis across both cores.
    if rows > 2 * sub:
        tm = min(tm, _round_up(pl.cdiv(rows, 2), sub))
    if tm >= rows:
        tm = rows  # single block == full extent (always a legal block shape)

    grid = (pl.cdiv(rows, tm),)  # ragged final block handled by Pallas masking

    return pl.pallas_call(
        _copy_kernel,
        out_shape=jax.ShapeDtypeStruct((rows, cols), x2d.dtype),
        grid=grid,
        in_specs=[pl.BlockSpec((tm, cols), lambda i: (i, 0))],
        out_specs=pl.BlockSpec((tm, cols), lambda i: (i, 0)),
        compiler_params=pltpu.CompilerParams(
            dimension_semantics=("parallel",),
            vmem_limit_bytes=_VMEM_LIMIT,
        ),
    )(x2d)


def decoder_passthrough(x: jax.Array, *, min_pallas_bytes: int = _BYPASS_BYTES) -> jax.Array:
    """Identity data path of the abstract Decoder, run as a Pallas kernel.

    Any input shape is accepted.  If the element count is a multiple of 128 we
    copy through a lane-dense [rows, 128] view (unmasked full-width stores);
    otherwise we keep the natural last dim as the lane axis.  No padding copies
    are ever materialized.
    """
    total = math.prod(x.shape)
    nbytes = total * jnp.dtype(x.dtype).itemsize
    if x.ndim == 0 or total == 0 or nbytes < min_pallas_bytes:
        # The data path is identity: below ~1 MiB the pallas_call launch costs
        # far more than the copy itself, so just return the input.
        return x

    if total % _LANE == 0:
        x2d = x.reshape(total // _LANE, _LANE)   # lane-dense bitcast reshape
    else:
        cols = x.shape[-1]
        x2d = x.reshape(total // cols, cols)     # full-last-dim block view
    y2d = _pallas_copy_2d(x2d)
    return y2d.reshape(x.shape)


class Decoder:
    """基本的解码器接口 (JAX/Pallas mirror of the abstract PyTorch base class)."""

    def __init__(self, *args, **kwargs) -> None:
        # Base class has no parameters.
        pass

    def init_state(self, enc_outputs, *args):
        raise NotImplementedError

    def forward(self, X, state):
        raise NotImplementedError


if __name__ == "__main__":
    key = jax.random.PRNGKey(0)
    k0, k1, k2 = jax.random.split(key, 3)

    # The abstract interface raises — verify that behaviour is preserved.
    dec = Decoder()
    try:
        dec.forward(None, None)
        raise AssertionError("Decoder.forward should raise NotImplementedError")
    except NotImplementedError:
        pass
    try:
        dec.init_state(None)
        raise AssertionError("Decoder.init_state should raise NotImplementedError")
    except NotImplementedError:
        pass

    # Small shape consistent with a decoder input: [batch, seq, hidden].
    batch, seq, hidden = 2, 8, 32
    x_small = jax.random.normal(k0, (batch, seq, hidden), dtype=jnp.float32)

    # 1) Default path: tiny input bypasses Pallas entirely (identity).
    y = decoder_passthrough(x_small)
    jax.block_until_ready(y)
    assert y.shape == x_small.shape and y.dtype == x_small.dtype
    assert bool(jnp.array_equal(y, x_small))

    # 2) Force the Pallas kernel on the small input (lane-dense view, single
    #    sub-tile block) to verify the kernel itself.
    y = decoder_passthrough(x_small, min_pallas_bytes=0)
    jax.block_until_ready(y)
    assert y.shape == x_small.shape and y.dtype == x_small.dtype
    assert bool(jnp.array_equal(y, x_small))

    # 3) Lane-dense path with a ragged final row-block (no padding copies).
    x_mid = jax.random.normal(k1, (3, 347, 128), dtype=jnp.float32)
    y = decoder_passthrough(x_mid, min_pallas_bytes=0)
    jax.block_until_ready(y)
    assert bool(jnp.array_equal(y, x_mid))

    # 4) Element count not a multiple of 128 -> full-last-dim block path.
    x_odd = jax.random.normal(k2, (2, 13, 37), dtype=jnp.float32)
    y = decoder_passthrough(x_odd, min_pallas_bytes=0)
    jax.block_until_ready(y)
    assert bool(jnp.array_equal(y, x_odd))

    print("KERNEL_OK")
</pallas_src>

<mosaic_0001>
module attributes {stable_mosaic.version = 11 : i64} {
  func.func @_copy_kernel(%arg0: i32, %arg1: memref<4x128xf32, #tpu.memory_space<vmem>>, %arg2: memref<4x128xf32, #tpu.memory_space<vmem>>) attributes {dimension_semantics = [#tpu.dimension_semantics<parallel>], iteration_bounds = array<i64: 1>, scalar_prefetch = 0 : i64, scratch_operands = 0 : i64, tpu.core_type = #tpu.core_type<tc>, window_params = [{transform_indices = @transform_0, window_bounds = array<i64: 4, 128>}, {transform_indices = @transform_1, window_bounds = array<i64: 4, 128>}]} {
    %c0 = arith.constant 0 : index
    %c0_0 = arith.constant 0 : index
    %0 = vector.load %arg1[%c0, %c0_0] : memref<4x128xf32, #tpu.memory_space<vmem>>, vector<4x128xf32>
    %c0_1 = arith.constant 0 : index
    %c0_2 = arith.constant 0 : index
    %1 = vector.load %arg2[%c0_1, %c0_2] : memref<4x128xf32, #tpu.memory_space<vmem>>, vector<4x128xf32>
    tpu.vector_store %arg2[%c0_1, %c0_2], %0 {strides = array<i32>} : memref<4x128xf32, #tpu.memory_space<vmem>>, vector<4x128xf32>,
    return
  }
  func.func @transform_0(%arg0: i32) -> (i32, i32) {
    %c0_i32 = arith.constant 0 : i32
    %c0_i32_0 = arith.constant 0 : i32
    return %arg0, %c0_i32 : i32, i32
  }
  func.func @transform_1(%arg0: i32) -> (i32, i32) {
    %c0_i32 = arith.constant 0 : i32
    %c0_i32_0 = arith.constant 0 : i32
    return %arg0, %c0_i32 : i32, i32
  }
}

</mosaic_0001>

<llo_original>
// kernel: tpu_custom_call.1
$region0: #{tpu_custom_call.1}
  #allocation0 [shape = 'u32[]', space=smem, size = 0x4, offset = 0x4, fixed_abs, tag = 'smem constant byte address 0x4 - core index']
  #allocation1 [shape = 'u32[144,128]{1,0:T(1,128)}', space=vmem, size = 0x12000, scoped, tag = 'internal scratch']
  %s0 = inlined_call_operand.hbm [shape: f32[4,128], index: 0, kind: input, shape index: {}]
  %s1 = inlined_call_operand.hbm [shape: f32[4,128], index: 1, kind: output, shape index: {}]
  %s2 = sld [smem:[#allocation0]]
  $region18: #{tpu_custom_call.1} parent=0
    _
  %s4 = ssub.s32 1, %s2
  %s5 = scalar_select 0, %s4, %s2
  $region1: #{tpu_custom_call.1} parent=0
    #allocation2 [shape = 'u8[2048]{0}', space=vmem, size = 0x800, scoped, tag = 'input window, operand 0, single buffered']
    #allocation3 [shape = 's32[1]{0}', space=sflag, size = 0x4, scoped, tag = 'scoped memory for tpu_custom_call.1']
    #allocation4 [shape = 's32[1]{0}', space=sflag, size = 0x4, scoped, tag = 'scoped memory for tpu_custom_call.1']
    #allocation5 [shape = 'u8[2048]{0}', space=vmem, size = 0x800, scoped, tag = 'output window, operand 0, single buffered']
    %6 = vsyncpa [#allocation3], 0
    %7 = vsyncpa [#allocation4], 0
    // Predicated region
    $region2: #{tpu_custom_call.1} parent=1 // pred_check
      _
    $region3: #{tpu_custom_call.1} parent=1 // pred_check_branch
      %9 = sbr.rel (0) target = $region5
    $region4: #{tpu_custom_call.1} parent=1 // pred_region
      %s11 = ssub.s32 64, 64
      %12 = vsyncadd [#allocation3], %s11
      %s14 = sshll.u32 [#allocation2], 4
      %s15 = int_to_ptr.vmem [resolvable:$true] %s14
      %17 = dma.hbm_to_vmem [thread:$0]  %s0, 64, %s15, [#allocation3]
    $region5: #{tpu_custom_call.1} parent=1 // pred_fallthru
      _
    // Predicated region
    $region6: #{tpu_custom_call.1} parent=1 // pred_check
      _
    $region7: #{tpu_custom_call.1} parent=1 // pred_check_branch
      %19 = sbr.rel (0) target = $region9
    $region8: #{tpu_custom_call.1} parent=1 // pred_region
      %20 = dma.done [#allocation3], 64
    $region9: #{tpu_custom_call.1} parent=1 // pred_fallthru
      _
    %v21 = vld [vmem:[#allocation2] sm:$0xf]
    %22 = vst [vmem:[#allocation5] sm:$0xf] %v21
    // Predicated region
    $region10: #{tpu_custom_call.1} parent=1 // pred_check
      _
    $region11: #{tpu_custom_call.1} parent=1 // pred_check_branch
      %24 = sbr.rel (0) target = $region13
    $region12: #{tpu_custom_call.1} parent=1 // pred_region
      %s26 = ssub.s32 64, 64
      %27 = vsyncadd [#allocation4], %s26
      %s29 = sshll.u32 [#allocation5], 4
      %s30 = int_to_ptr.vmem [resolvable:$true] %s29
      %32 = dma.vmem_to_hbm [thread:$0]  %s30, 64, %s1, [#allocation4]
    $region13: #{tpu_custom_call.1} parent=1 // pred_fallthru
      _
    // Predicated region
    $region14: #{tpu_custom_call.1} parent=1 // pred_check
      _
    $region15: #{tpu_custom_call.1} parent=1 // pred_check_branch
      %34 = sbr.rel (0) target = $region17
    $region16: #{tpu_custom_call.1} parent=1 // pred_region
      %35 = dma.done [#allocation4], 64
    $region17: #{tpu_custom_call.1} parent=1 // pred_fallthru
      _
    %36 = vsyncpa [#allocation3], 1
    %37 = vsyncpa [#allocation4], 1

</llo_original>
